<compile_context>
chip_gen: v6e
topology: v6e:2x2x1
jax: 0.10.0
libtpu: 0.0.40
codegen_flags: <defaults>
</compile_context>

<pallas_src>
import numpy as np
import jax
import jax.numpy as jnp
from jax.experimental import pallas as pl
from jax.experimental.pallas import tpu as pltpu


# ----------------------------------------------------------------------------
# Kernel: conv1+bn1+relu -> conv2+bn2+relu -> maxpool, one batch image per step
# ----------------------------------------------------------------------------
def _downsample_kernel(x_ref, m_ref, w1_ref, b1_ref, w2_ref, b2_ref,
                       y_ref, p_ref, vmax_ref):
    hw = x_ref.shape[2]                      # flattened H*W (lane dim)
    h2, w, c_out = vmax_ref.shape            # (H//2, W, Cout_p)
    h = 2 * h2

    def conv3x3_bn_relu(xin, w_ref, b_ref):
        """3x3 same-conv (+folded BN) + ReLU as ONE fat matmul.

        xin: (c_src, H*W) f32.  Returns (c_out, H*W) f32.
        """
        taps = []
        for t in range(9):
            dy, dx = t // 3, t % 3
            s = (dy - 1) * w + (dx - 1)      # source offset in flat H*W space
            tap = xin if s == 0 else pltpu.roll(xin, shift=(-s) % hw, axis=1)
            if s != 0:
                tap = tap * m_ref[t]         # (1, H*W) halo mask, broadcast
            taps.append(tap)
        # Sublane-aligned concat (each tap is a multiple of 8 rows).
        patch = jnp.concatenate(taps, axis=0)                    # (9*c_src, H*W)
        acc = jnp.dot(w_ref[...], patch,
                      preferred_element_type=jnp.float32)        # (c_out, H*W)
        return jnp.maximum(acc + b_ref[...], 0.0)

    # ---- conv1 (+folded BN1) + ReLU, conv2 (+folded BN2) + ReLU -------------
    hid = conv3x3_bn_relu(x_ref[0], w1_ref, b1_ref)
    y = conv3x3_bn_relu(hid, w2_ref, b2_ref)

    # Full-resolution activation: lane-dense (Cout, H*W) store, NCHW-compatible.
    y_ref[0] = y.astype(y_ref.dtype)

    # ---- fused 2x2 / stride-2 max pool --------------------------------------
    y3 = jnp.transpose(y).reshape(h, w, c_out)                   # W on sublanes
    rowmax = jnp.max(y3.reshape(h2, 2, w, c_out), axis=1)        # row pairs
    cm = jnp.maximum(rowmax, pltpu.roll(rowmax, shift=w - 1, axis=1))
    vmax_ref[...] = cm
    p_ref[0] = vmax_ref[:, pl.ds(0, w // 2, 2), :].astype(p_ref.dtype)


# ----------------------------------------------------------------------------
# Wrapper helpers: BN folding, halo masks
# ----------------------------------------------------------------------------
def _fold_conv_bn(w, b, gamma, beta, mean, var, eps, c_src_p, c_dst_p):
    """Fold eval-mode BN into the conv.

    Returns weights (c_dst_p, 9*c_src_p) matching the in-kernel im2col patch
    ordering (tap-major, then input channel) and bias (c_dst_p, 1).
    """
    c_dst, c_src = w.shape[0], w.shape[1]
    s = gamma / jnp.sqrt(var + eps)                              # (c_dst,)
    w_f = w * s[:, None, None, None]                             # (c_dst, c_src, 3, 3)
    b_f = (b - mean) * s + beta                                  # (c_dst,)
    wt = jnp.transpose(w_f, (0, 2, 3, 1))                        # (c_dst, 3, 3, c_src)
    wt = jnp.pad(wt, ((0, c_dst_p - c_dst), (0, 0), (0, 0), (0, c_src_p - c_src)))
    b_f = jnp.pad(b_f, (0, c_dst_p - c_dst))
    return (wt.reshape(c_dst_p, 9 * c_src_p).astype(jnp.float32),
            b_f.reshape(-1, 1).astype(jnp.float32))


def _halo_masks(h, w):
    """(9, 1, H*W) {0,1} masks: mask[t, 0, q] = 1 iff tap t's source is in-bounds."""
    q = np.arange(h * w)
    row, col = q // w, q % w
    m = np.ones((9, 1, h * w), np.float32)
    for t in range(9):
        dy, dx = t // 3, t % 3
        ok = np.ones(h * w, bool)
        if dy == 0:
            ok &= row >= 1
        if dy == 2:
            ok &= row <= h - 2
        if dx == 0:
            ok &= col >= 1
        if dx == 2:
            ok &= col <= w - 2
        m[t, 0] = ok
    return jnp.asarray(m)


# ----------------------------------------------------------------------------
# Wrapper: layout plumbing + pallas_call with a batch-parallel grid
# ----------------------------------------------------------------------------
@jax.jit
def downsample_block_forward(x_nchw, params):
    """Eval-mode forward of Downsample_block. Returns (pooled, y), both NCHW."""
    eps = 1e-5
    n, c_in, h, w = x_nchw.shape
    c_out = params["w1"].shape[0]
    assert h % 2 == 0 and w % 2 == 0 and w % 8 == 0, \
        "kernel assumes even H/W and W a multiple of 8"
    hw = h * w
    c_in_p = -(-c_in // 8) * 8
    c_out_p = -(-c_out // 8) * 8

    w1m, b1v = _fold_conv_bn(params["w1"], params["b1"], params["g1"],
                             params["beta1"], params["m1"], params["v1"],
                             eps, c_in_p, c_out_p)
    w2m, b2v = _fold_conv_bn(params["w2"], params["b2"], params["g2"],
                             params["beta2"], params["m2"], params["v2"],
                             eps, c_out_p, c_out_p)
    masks = _halo_masks(h, w)

    # NCHW -> (N, Cin_p, H*W): pure minor-dim reshape + zero channel pad (no transpose).
    x_flat = jnp.pad(x_nchw.astype(jnp.float32).reshape(n, c_in, hw),
                     ((0, 0), (0, c_in_p - c_in), (0, 0)))

    y_flat, p_nhwc = pl.pallas_call(
        _downsample_kernel,
        grid=(n,),
        in_specs=[
            pl.BlockSpec((1, c_in_p, hw), lambda i: (i, 0, 0)),
            pl.BlockSpec((9, 1, hw), lambda i: (0, 0, 0)),
            pl.BlockSpec((c_out_p, 9 * c_in_p), lambda i: (0, 0)),
            pl.BlockSpec((c_out_p, 1), lambda i: (0, 0)),
            pl.BlockSpec((c_out_p, 9 * c_out_p), lambda i: (0, 0)),
            pl.BlockSpec((c_out_p, 1), lambda i: (0, 0)),
        ],
        out_specs=[
            pl.BlockSpec((1, c_out_p, hw), lambda i: (i, 0, 0)),
            pl.BlockSpec((1, h // 2, w // 2, c_out_p), lambda i: (i, 0, 0, 0)),
        ],
        out_shape=[
            jax.ShapeDtypeStruct((n, c_out_p, hw), jnp.float32),
            jax.ShapeDtypeStruct((n, h // 2, w // 2, c_out_p), jnp.float32),
        ],
        scratch_shapes=[
            pltpu.VMEM((h // 2, w, c_out_p), jnp.float32),   # row-pooled buffer
        ],
        compiler_params=pltpu.CompilerParams(
            dimension_semantics=("parallel",)),
    )(x_flat, masks, w1m, b1v, w2m, b2v)

    y = y_flat[:, :c_out, :].reshape(n, c_out, h, w)             # free reshape, NCHW
    pooled = jnp.transpose(p_nhwc[..., :c_out], (0, 3, 1, 2))    # small NHWC->NCHW
    return pooled, y


# ----------------------------------------------------------------------------
# Deterministic parameters + pure-JAX reference (conv/BN/relu/maxpool, NCHW)
# ----------------------------------------------------------------------------
def init_params(key, c_in, c_out):
    ks = jax.random.split(key, 12)
    b1 = 1.0 / (c_in * 9) ** 0.5
    b2 = 1.0 / (c_out * 9) ** 0.5
    return {
        "w1": jax.random.uniform(ks[0], (c_out, c_in, 3, 3), jnp.float32, -b1, b1),
        "b1": jax.random.uniform(ks[1], (c_out,), jnp.float32, -b1, b1),
        "g1": jax.random.uniform(ks[2], (c_out,), jnp.float32, 0.5, 1.5),
        "beta1": 0.1 * jax.random.normal(ks[3], (c_out,), jnp.float32),
        "m1": 0.1 * jax.random.normal(ks[4], (c_out,), jnp.float32),
        "v1": jax.random.uniform(ks[5], (c_out,), jnp.float32, 0.5, 1.5),
        "w2": jax.random.uniform(ks[6], (c_out, c_out, 3, 3), jnp.float32, -b2, b2),
        "b2": jax.random.uniform(ks[7], (c_out,), jnp.float32, -b2, b2),
        "g2": jax.random.uniform(ks[8], (c_out,), jnp.float32, 0.5, 1.5),
        "beta2": 0.1 * jax.random.normal(ks[9], (c_out,), jnp.float32),
        "m2": 0.1 * jax.random.normal(ks[10], (c_out,), jnp.float32),
        "v2": jax.random.uniform(ks[11], (c_out,), jnp.float32, 0.5, 1.5),
    }


def reference_forward(x_nchw, p):
    eps = 1e-5

    def conv_bn_relu(h, w, b, gamma, beta, mean, var):
        h = jax.lax.conv_general_dilated(
            h, w, window_strides=(1, 1), padding=((1, 1), (1, 1)),
            dimension_numbers=("NCHW", "OIHW", "NCHW"),
            precision=jax.lax.Precision.HIGHEST)
        h = h + b[None, :, None, None]
        s = gamma / jnp.sqrt(var + eps)
        h = (h - mean[None, :, None, None]) * s[None, :, None, None] \
            + beta[None, :, None, None]
        return jnp.maximum(h, 0.0)

    h = conv_bn_relu(x_nchw, p["w1"], p["b1"], p["g1"], p["beta1"], p["m1"], p["v1"])
    y = conv_bn_relu(h, p["w2"], p["b2"], p["g2"], p["beta2"], p["m2"], p["v2"])
    pooled = jax.lax.reduce_window(y, -jnp.inf, jax.lax.max,
                                   (1, 1, 2, 2), (1, 1, 2, 2), "VALID")
    return pooled, y


if __name__ == "__main__":
    key = jax.random.PRNGKey(0)
    k_x, k_p = jax.random.split(key)

    N, C_IN, H, W = 2, 4, 16, 16
    C_OUT = 8

    x = jax.random.normal(k_x, (N, C_IN, H, W), jnp.float32)
    params = init_params(k_p, C_IN, C_OUT)

    pooled, y = downsample_block_forward(x, params)
    pooled = jax.block_until_ready(pooled)
    y = jax.block_until_ready(y)

    pooled_want, y_want = reference_forward(x, params)

    assert pooled.shape == (N, C_OUT, H // 2, W // 2), pooled.shape
    assert y.shape == (N, C_OUT, H, W), y.shape
    assert jnp.allclose(y, y_want, atol=1e-3, rtol=1e-3), \
        float(jnp.max(jnp.abs(y - y_want)))
    assert jnp.allclose(pooled, pooled_want, atol=1e-3, rtol=1e-3), \
        float(jnp.max(jnp.abs(pooled - pooled_want)))

    print("KERNEL_OK")
</pallas_src>

<mosaic_0001>
module attributes {stable_mosaic.version = 11 : i64} {
  func.func @_downsample_kernel(%arg0: i32, %arg1: memref<1x8x256xf32, #tpu.memory_space<vmem>>, %arg2: memref<9x1x256xf32, #tpu.memory_space<vmem>>, %arg3: memref<8x72xf32, #tpu.memory_space<vmem>>, %arg4: memref<8x1xf32, #tpu.memory_space<vmem>>, %arg5: memref<8x72xf32, #tpu.memory_space<vmem>>, %arg6: memref<8x1xf32, #tpu.memory_space<vmem>>, %arg7: memref<1x8x256xf32, #tpu.memory_space<vmem>>, %arg8: memref<1x8x8x8xf32, #tpu.memory_space<vmem>>, %arg9: memref<8x16x8xf32, #tpu.memory_space<vmem>>) attributes {dimension_semantics = [#tpu.dimension_semantics<parallel>], iteration_bounds = array<i64: 2>, scalar_prefetch = 0 : i64, scratch_operands = 1 : i64, tpu.core_type = #tpu.core_type<tc>, window_params = [{transform_indices = @transform_0, window_bounds = array<i64: 1, 8, 256>}, {pipeline_mode = #tpu.pipeline_mode<synchronous>, transform_indices = @transform_1, window_bounds = array<i64: 9, 1, 256>}, {pipeline_mode = #tpu.pipeline_mode<synchronous>, transform_indices = @transform_2, window_bounds = array<i64: 8, 72>}, {pipeline_mode = #tpu.pipeline_mode<synchronous>, transform_indices = @transform_3, window_bounds = array<i64: 8, 1>}, {pipeline_mode = #tpu.pipeline_mode<synchronous>, transform_indices = @transform_4, window_bounds = array<i64: 8, 72>}, {pipeline_mode = #tpu.pipeline_mode<synchronous>, transform_indices = @transform_5, window_bounds = array<i64: 8, 1>}, {transform_indices = @transform_6, window_bounds = array<i64: 1, 8, 256>}, {transform_indices = @transform_7, window_bounds = array<i64: 1, 8, 8, 8>}]} {
    %c0 = arith.constant 0 : index
    %c0_0 = arith.constant 0 : index
    %c0_1 = arith.constant 0 : index
    %0 = vector.load %arg1[%c0, %c0_0, %c0_1] : memref<1x8x256xf32, #tpu.memory_space<vmem>>, vector<1x8x256xf32>
    %1 = vector.shape_cast %0 : vector<1x8x256xf32> to vector<8x256xf32>
    %c17_i32 = arith.constant 17 : i32
    %2 = tpu.dynamic_rotate %1 by %c17_i32 dim 1 : vector<8x256xf32>, i32 -> vector<8x256xf32>
    %c0_2 = arith.constant 0 : index
    %c0_3 = arith.constant 0 : index
    %c0_4 = arith.constant 0 : index
    %3 = vector.load %arg2[%c0_2, %c0_3, %c0_4] : memref<9x1x256xf32, #tpu.memory_space<vmem>>, vector<1x1x256xf32>
    %4 = vector.shape_cast %3 : vector<1x1x256xf32> to vector<1x256xf32>
    %5 = vector.broadcast %4 : vector<1x256xf32> to vector<8x256xf32>
    %6 = arith.mulf %2, %5 : vector<8x256xf32>
    %c16_i32 = arith.constant 16 : i32
    %7 = tpu.dynamic_rotate %1 by %c16_i32 dim 1 : vector<8x256xf32>, i32 -> vector<8x256xf32>
    %c1 = arith.constant 1 : index
    %c0_5 = arith.constant 0 : index
    %c0_6 = arith.constant 0 : index
    %8 = vector.load %arg2[%c1, %c0_5, %c0_6] : memref<9x1x256xf32, #tpu.memory_space<vmem>>, vector<1x1x256xf32>
    %9 = vector.shape_cast %8 : vector<1x1x256xf32> to vector<1x256xf32>
    %10 = vector.broadcast %9 : vector<1x256xf32> to vector<8x256xf32>
    %11 = arith.mulf %7, %10 : vector<8x256xf32>
    %c15_i32 = arith.constant 15 : i32
    %12 = tpu.dynamic_rotate %1 by %c15_i32 dim 1 : vector<8x256xf32>, i32 -> vector<8x256xf32>
    %c2 = arith.constant 2 : index
    %c0_7 = arith.constant 0 : index
    %c0_8 = arith.constant 0 : index
    %13 = vector.load %arg2[%c2, %c0_7, %c0_8] : memref<9x1x256xf32, #tpu.memory_space<vmem>>, vector<1x1x256xf32>
    %14 = vector.shape_cast %13 : vector<1x1x256xf32> to vector<1x256xf32>
    %15 = vector.broadcast %14 : vector<1x256xf32> to vector<8x256xf32>
    %16 = arith.mulf %12, %15 : vector<8x256xf32>
    %c1_i32 = arith.constant 1 : i32
    %17 = tpu.dynamic_rotate %1 by %c1_i32 dim 1 : vector<8x256xf32>, i32 -> vector<8x256xf32>
    %c3 = arith.constant 3 : index
    %c0_9 = arith.constant 0 : index
    %c0_10 = arith.constant 0 : index
    %18 = vector.load %arg2[%c3, %c0_9, %c0_10] : memref<9x1x256xf32, #tpu.memory_space<vmem>>, vector<1x1x256xf32>
    %19 = vector.shape_cast %18 : vector<1x1x256xf32> to vector<1x256xf32>
    %20 = vector.broadcast %19 : vector<1x256xf32> to vector<8x256xf32>
    %21 = arith.mulf %17, %20 : vector<8x256xf32>
    %c255_i32 = arith.constant 255 : i32
    %22 = tpu.dynamic_rotate %1 by %c255_i32 dim 1 : vector<8x256xf32>, i32 -> vector<8x256xf32>
    %c5 = arith.constant 5 : index
    %c0_11 = arith.constant 0 : index
    %c0_12 = arith.constant 0 : index
    %23 = vector.load %arg2[%c5, %c0_11, %c0_12] : memref<9x1x256xf32, #tpu.memory_space<vmem>>, vector<1x1x256xf32>
    %24 = vector.shape_cast %23 : vector<1x1x256xf32> to vector<1x256xf32>
    %25 = vector.broadcast %24 : vector<1x256xf32> to vector<8x256xf32>
    %26 = arith.mulf %22, %25 : vector<8x256xf32>
    %c241_i32 = arith.constant 241 : i32
    %27 = tpu.dynamic_rotate %1 by %c241_i32 dim 1 : vector<8x256xf32>, i32 -> vector<8x256xf32>
    %c6 = arith.constant 6 : index
    %c0_13 = arith.constant 0 : index
    %c0_14 = arith.constant 0 : index
    %28 = vector.load %arg2[%c6, %c0_13, %c0_14] : memref<9x1x256xf32, #tpu.memory_space<vmem>>, vector<1x1x256xf32>
    %29 = vector.shape_cast %28 : vector<1x1x256xf32> to vector<1x256xf32>
    %30 = vector.broadcast %29 : vector<1x256xf32> to vector<8x256xf32>
    %31 = arith.mulf %27, %30 : vector<8x256xf32>
    %c240_i32 = arith.constant 240 : i32
    %32 = tpu.dynamic_rotate %1 by %c240_i32 dim 1 : vector<8x256xf32>, i32 -> vector<8x256xf32>
    %c7 = arith.constant 7 : index
    %c0_15 = arith.constant 0 : index
    %c0_16 = arith.constant 0 : index
    %33 = vector.load %arg2[%c7, %c0_15, %c0_16] : memref<9x1x256xf32, #tpu.memory_space<vmem>>, vector<1x1x256xf32>
    %34 = vector.shape_cast %33 : vector<1x1x256xf32> to vector<1x256xf32>
    %35 = vector.broadcast %34 : vector<1x256xf32> to vector<8x256xf32>
    %36 = arith.mulf %32, %35 : vector<8x256xf32>
    %c239_i32 = arith.constant 239 : i32
    %37 = tpu.dynamic_rotate %1 by %c239_i32 dim 1 : vector<8x256xf32>, i32 -> vector<8x256xf32>
    %c8 = arith.constant 8 : index
    %c0_17 = arith.constant 0 : index
    %c0_18 = arith.constant 0 : index
    %38 = vector.load %arg2[%c8, %c0_17, %c0_18] : memref<9x1x256xf32, #tpu.memory_space<vmem>>, vector<1x1x256xf32>
    %39 = vector.shape_cast %38 : vector<1x1x256xf32> to vector<1x256xf32>
    %40 = vector.broadcast %39 : vector<1x256xf32> to vector<8x256xf32>
    %41 = arith.mulf %37, %40 : vector<8x256xf32>
    %42 = tpu.concatenate %6, %11, %16, %21, %1, %26, %31, %36, %41 in 0 : vector<8x256xf32>, vector<8x256xf32>, vector<8x256xf32>, vector<8x256xf32>, vector<8x256xf32>, vector<8x256xf32>, vector<8x256xf32>, vector<8x256xf32>, vector<8x256xf32> -> vector<72x256xf32>
    %c0_19 = arith.constant 0 : index
    %c0_20 = arith.constant 0 : index
    %43 = vector.load %arg3[%c0_19, %c0_20] : memref<8x72xf32, #tpu.memory_space<vmem>>, vector<8x72xf32>
    %cst = arith.constant dense<0.000000e+00> : vector<8x256xf32>
    %44 = tpu.matmul %43, %42, %cst {dimension_numbers = #tpu.dot_dimension_numbers<[1], [0], [0], [1], [0, 0, 1, 1], [], []>} : vector<8x72xf32>, vector<72x256xf32>, vector<8x256xf32> -> vector<8x256xf32>
    %c0_21 = arith.constant 0 : index
    %c0_22 = arith.constant 0 : index
    %45 = vector.load %arg4[%c0_21, %c0_22] : memref<8x1xf32, #tpu.memory_space<vmem>>, vector<8x1xf32>
    %46 = vector.broadcast %45 : vector<8x1xf32> to vector<8x256xf32>
    %47 = arith.addf %44, %46 : vector<8x256xf32>
    %cst_23 = arith.constant 0.000000e+00 : f32
    %48 = vector.broadcast %cst_23 : f32 to vector<8x256xf32>
    %49 = arith.maximumf %47, %48 : vector<8x256xf32>
    %c17_i32_24 = arith.constant 17 : i32
    %50 = tpu.dynamic_rotate %49 by %c17_i32_24 dim 1 : vector<8x256xf32>, i32 -> vector<8x256xf32>
    %c0_25 = arith.constant 0 : index
    %c0_26 = arith.constant 0 : index
    %c0_27 = arith.constant 0 : index
    %51 = vector.load %arg2[%c0_25, %c0_26, %c0_27] : memref<9x1x256xf32, #tpu.memory_space<vmem>>, vector<1x1x256xf32>
    %52 = vector.shape_cast %51 : vector<1x1x256xf32> to vector<1x256xf32>
    %53 = vector.broadcast %52 : vector<1x256xf32> to vector<8x256xf32>
    %54 = arith.mulf %50, %53 : vector<8x256xf32>
    %c16_i32_28 = arith.constant 16 : i32
    %55 = tpu.dynamic_rotate %49 by %c16_i32_28 dim 1 : vector<8x256xf32>, i32 -> vector<8x256xf32>
    %c1_29 = arith.constant 1 : index
    %c0_30 = arith.constant 0 : index
    %c0_31 = arith.constant 0 : index
    %56 = vector.load %arg2[%c1_29, %c0_30, %c0_31] : memref<9x1x256xf32, #tpu.memory_space<vmem>>, vector<1x1x256xf32>
    %57 = vector.shape_cast %56 : vector<1x1x256xf32> to vector<1x256xf32>
    %58 = vector.broadcast %57 : vector<1x256xf32> to vector<8x256xf32>
    %59 = arith.mulf %55, %58 : vector<8x256xf32>
    %c15_i32_32 = arith.constant 15 : i32
    %60 = tpu.dynamic_rotate %49 by %c15_i32_32 dim 1 : vector<8x256xf32>, i32 -> vector<8x256xf32>
    %c2_33 = arith.constant 2 : index
    %c0_34 = arith.constant 0 : index
    %c0_35 = arith.constant 0 : index
    %61 = vector.load %arg2[%c2_33, %c0_34, %c0_35] : memref<9x1x256xf32, #tpu.memory_space<vmem>>, vector<1x1x256xf32>
    %62 = vector.shape_cast %61 : vector<1x1x256xf32> to vector<1x256xf32>
    %63 = vector.broadcast %62 : vector<1x256xf32> to vector<8x256xf32>
    %64 = arith.mulf %60, %63 : vector<8x256xf32>
    %c1_i32_36 = arith.constant 1 : i32
    %65 = tpu.dynamic_rotate %49 by %c1_i32_36 dim 1 : vector<8x256xf32>, i32 -> vector<8x256xf32>
    %c3_37 = arith.constant 3 : index
    %c0_38 = arith.constant 0 : index
    %c0_39 = arith.constant 0 : index
    %66 = vector.load %arg2[%c3_37, %c0_38, %c0_39] : memref<9x1x256xf32, #tpu.memory_space<vmem>>, vector<1x1x256xf32>
    %67 = vector.shape_cast %66 : vector<1x1x256xf32> to vector<1x256xf32>
    %68 = vector.broadcast %67 : vector<1x256xf32> to vector<8x256xf32>
    %69 = arith.mulf %65, %68 : vector<8x256xf32>
    %c255_i32_40 = arith.constant 255 : i32
    %70 = tpu.dynamic_rotate %49 by %c255_i32_40 dim 1 : vector<8x256xf32>, i32 -> vector<8x256xf32>
    %c5_41 = arith.constant 5 : index
    %c0_42 = arith.constant 0 : index
    %c0_43 = arith.constant 0 : index
    %71 = vector.load %arg2[%c5_41, %c0_42, %c0_43] : memref<9x1x256xf32, #tpu.memory_space<vmem>>, vector<1x1x256xf32>
    %72 = vector.shape_cast %71 : vector<1x1x256xf32> to vector<1x256xf32>
    %73 = vector.broadcast %72 : vector<1x256xf32> to vector<8x256xf32>
    %74 = arith.mulf %70, %73 : vector<8x256xf32>
    %c241_i32_44 = arith.constant 241 : i32
    %75 = tpu.dynamic_rotate %49 by %c241_i32_44 dim 1 : vector<8x256xf32>, i32 -> vector<8x256xf32>
    %c6_45 = arith.constant 6 : index
    %c0_46 = arith.constant 0 : index
    %c0_47 = arith.constant 0 : index
    %76 = vector.load %arg2[%c6_45, %c0_46, %c0_47] : memref<9x1x256xf32, #tpu.memory_space<vmem>>, vector<1x1x256xf32>
    %77 = vector.shape_cast %76 : vector<1x1x256xf32> to vector<1x256xf32>
    %78 = vector.broadcast %77 : vector<1x256xf32> to vector<8x256xf32>
    %79 = arith.mulf %75, %78 : vector<8x256xf32>
    %c240_i32_48 = arith.constant 240 : i32
    %80 = tpu.dynamic_rotate %49 by %c240_i32_48 dim 1 : vector<8x256xf32>, i32 -> vector<8x256xf32>
    %c7_49 = arith.constant 7 : index
    %c0_50 = arith.constant 0 : index
    %c0_51 = arith.constant 0 : index
    %81 = vector.load %arg2[%c7_49, %c0_50, %c0_51] : memref<9x1x256xf32, #tpu.memory_space<vmem>>, vector<1x1x256xf32>
    %82 = vector.shape_cast %81 : vector<1x1x256xf32> to vector<1x256xf32>
    %83 = vector.broadcast %82 : vector<1x256xf32> to vector<8x256xf32>
    %84 = arith.mulf %80, %83 : vector<8x256xf32>
    %c239_i32_52 = arith.constant 239 : i32
    %85 = tpu.dynamic_rotate %49 by %c239_i32_52 dim 1 : vector<8x256xf32>, i32 -> vector<8x256xf32>
    %c8_53 = arith.constant 8 : index
    %c0_54 = arith.constant 0 : index
    %c0_55 = arith.constant 0 : index
    %86 = vector.load %arg2[%c8_53, %c0_54, %c0_55] : memref<9x1x256xf32, #tpu.memory_space<vmem>>, vector<1x1x256xf32>
    %87 = vector.shape_cast %86 : vector<1x1x256xf32> to vector<1x256xf32>
    %88 = vector.broadcast %87 : vector<1x256xf32> to vector<8x256xf32>
    %89 = arith.mulf %85, %88 : vector<8x256xf32>
    %90 = tpu.concatenate %54, %59, %64, %69, %49, %74, %79, %84, %89 in 0 : vector<8x256xf32>, vector<8x256xf32>, vector<8x256xf32>, vector<8x256xf32>, vector<8x256xf32>, vector<8x256xf32>, vector<8x256xf32>, vector<8x256xf32>, vector<8x256xf32> -> vector<72x256xf32>
    %c0_56 = arith.constant 0 : index
    %c0_57 = arith.constant 0 : index
    %91 = vector.load %arg5[%c0_56, %c0_57] : memref<8x72xf32, #tpu.memory_space<vmem>>, vector<8x72xf32>
    %cst_58 = arith.constant dense<0.000000e+00> : vector<8x256xf32>
    %92 = tpu.matmul %91, %90, %cst_58 {dimension_numbers = #tpu.dot_dimension_numbers<[1], [0], [0], [1], [0, 0, 1, 1], [], []>} : vector<8x72xf32>, vector<72x256xf32>, vector<8x256xf32> -> vector<8x256xf32>
    %c0_59 = arith.constant 0 : index
    %c0_60 = arith.constant 0 : index
    %93 = vector.load %arg6[%c0_59, %c0_60] : memref<8x1xf32, #tpu.memory_space<vmem>>, vector<8x1xf32>
    %94 = vector.broadcast %93 : vector<8x1xf32> to vector<8x256xf32>
    %95 = arith.addf %92, %94 : vector<8x256xf32>
    %cst_61 = arith.constant 0.000000e+00 : f32
    %96 = vector.broadcast %cst_61 : f32 to vector<8x256xf32>
    %97 = arith.maximumf %95, %96 : vector<8x256xf32>
    %c0_62 = arith.constant 0 : index
    %c0_63 = arith.constant 0 : index
    %c0_64 = arith.constant 0 : index
    %98 = vector.load %arg7[%c0_62, %c0_63, %c0_64] : memref<1x8x256xf32, #tpu.memory_space<vmem>>, vector<1x8x256xf32>
    %99 = vector.shape_cast %98 : vector<1x8x256xf32> to vector<8x256xf32>
    %100 = vector.shape_cast %97 : vector<8x256xf32> to vector<1x8x256xf32>
    tpu.vector_store %arg7[%c0_62, %c0_63, %c0_64], %100 {strides = array<i32>} : memref<1x8x256xf32, #tpu.memory_space<vmem>>, vector<1x8x256xf32>,
    %101 = tpu.transpose %97, [1, 0] : vector<8x256xf32> -> vector<256x8xf32>
    %102 = vector.shape_cast %101 : vector<256x8xf32> to vector<16x16x8xf32>
    %103 = vector.shape_cast %102 : vector<16x16x8xf32> to vector<8x2x16x8xf32>
    %cst_65 = arith.constant dense<0xFF800000> : vector<8x16x8xf32>
    %104 = vector.multi_reduction <maximumf>, %103, %cst_65 [1] : vector<8x2x16x8xf32> to vector<8x16x8xf32>
    %c15_i32_66 = arith.constant 15 : i32
    %105 = tpu.dynamic_rotate %104 by %c15_i32_66 dim 1 : vector<8x16x8xf32>, i32 -> vector<8x16x8xf32>
    %106 = arith.maximumf %104, %105 : vector<8x16x8xf32>
    %c0_67 = arith.constant 0 : index
    %c0_68 = arith.constant 0 : index
    %c0_69 = arith.constant 0 : index
    %107 = vector.load %arg9[%c0_67, %c0_68, %c0_69] : memref<8x16x8xf32, #tpu.memory_space<vmem>>, vector<8x16x8xf32>
    tpu.vector_store %arg9[%c0_67, %c0_68, %c0_69], %106 {strides = array<i32>} : memref<8x16x8xf32, #tpu.memory_space<vmem>>, vector<8x16x8xf32>,
    %c0_70 = arith.constant 0 : index
    %c0_71 = arith.constant 0 : index
    %c0_72 = arith.constant 0 : index
    %108 = tpu.strided_load %arg9[%c0_70, %c0_71, %c0_72] {strides = array<i32: 1, 2, 1>} : memref<8x16x8xf32, #tpu.memory_space<vmem>>, vector<8x8x8xf32>
    %c0_73 = arith.constant 0 : index
    %c0_74 = arith.constant 0 : index
    %c0_75 = arith.constant 0 : index
    %c0_76 = arith.constant 0 : index
    %109 = vector.load %arg8[%c0_73, %c0_74, %c0_75, %c0_76] : memref<1x8x8x8xf32, #tpu.memory_space<vmem>>, vector<1x8x8x8xf32>
    %110 = vector.shape_cast %109 : vector<1x8x8x8xf32> to vector<8x8x8xf32>
    %111 = vector.shape_cast %108 : vector<8x8x8xf32> to vector<1x8x8x8xf32>
    tpu.vector_store %arg8[%c0_73, %c0_74, %c0_75, %c0_76], %111 {strides = array<i32>} : memref<1x8x8x8xf32, #tpu.memory_space<vmem>>, vector<1x8x8x8xf32>,
    return
  }
  func.func @transform_0(%arg0: i32) -> (i32, i32, i32) {
    %c0_i32 = arith.constant 0 : i32
    %c0_i32_0 = arith.constant 0 : i32
    %c0_i32_1 = arith.constant 0 : i32
    return %arg0, %c0_i32, %c0_i32_0 : i32, i32, i32
  }
  func.func @transform_1(%arg0: i32) -> (i32, i32, i32) {
    %c0_i32 = arith.constant 0 : i32
    %c0_i32_0 = arith.constant 0 : i32
    %c0_i32_1 = arith.constant 0 : i32
    %c0_i32_2 = arith.constant 0 : i32
    return %c0_i32, %c0_i32_0, %c0_i32_1 : i32, i32, i32
  }
  func.func @transform_2(%arg0: i32) -> (i32, i32) {
    %c0_i32 = arith.constant 0 : i32
    %c0_i32_0 = arith.constant 0 : i32
    %c0_i32_1 = arith.constant 0 : i32
    return %c0_i32, %c0_i32_0 : i32, i32
  }
  func.func @transform_3(%arg0: i32) -> (i32, i32) {
    %c0_i32 = arith.constant 0 : i32
    %c0_i32_0 = arith.constant 0 : i32
    %c0_i32_1 = arith.constant 0 : i32
    return %c0_i32, %c0_i32_0 : i32, i32
  }
  func.func @transform_4(%arg0: i32) -> (i32, i32) {
    %c0_i32 = arith.constant 0 : i32
    %c0_i32_0 = arith.constant 0 : i32
    %c0_i32_1 = arith.constant 0 : i32
    return %c0_i32, %c0_i32_0 : i32, i32
  }
  func.func @transform_5(%arg0: i32) -> (i32, i32) {
    %c0_i32 = arith.constant 0 : i32
    %c0_i32_0 = arith.constant 0 : i32
    %c0_i32_1 = arith.constant 0 : i32
    return %c0_i32, %c0_i32_0 : i32, i32
  }
  func.func @transform_6(%arg0: i32) -> (i32, i32, i32) {
    %c0_i32 = arith.constant 0 : i32
    %c0_i32_0 = arith.constant 0 : i32
    %c0_i32_1 = arith.constant 0 : i32
    return %arg0, %c0_i32, %c0_i32_0 : i32, i32, i32
  }
  func.func @transform_7(%arg0: i32) -> (i32, i32, i32, i32) {
    %c0_i32 = arith.constant 0 : i32
    %c0_i32_0 = arith.constant 0 : i32
    %c0_i32_1 = arith.constant 0 : i32
    %c0_i32_2 = arith.constant 0 : i32
    return %arg0, %c0_i32, %c0_i32_0, %c0_i32_1 : i32, i32, i32, i32
  }
}

</mosaic_0001>

<llo_original>
// kernel: downsample_block_forward.1
$region0: #{downsample_block_forward.1}
  #allocation0 [shape = 'u32[]', space=smem, size = 0x4, offset = 0x4, fixed_abs, tag = 'smem constant byte address 0x4 - core index']
  #allocation1 [shape = 'u32[144,128]{1,0:T(1,128)}', space=vmem, size = 0x12000, scoped, tag = 'internal scratch']
  #allocation2 [shape = 'f32[8,16,8]{2,1,0:T(8,128)}', space=vmem, size = 0x10000, scoped, tag = 'scratch operand']
  %s0 = inlined_call_operand.vmem [shape: f32[2,8,256], index: 0, kind: input, shape index: {}]
  %s1 = inlined_call_operand.vmem [shape: f32[9,1,256], index: 1, kind: input, shape index: {}]
  %s2 = inlined_call_operand.vmem [shape: f32[8,72], index: 2, kind: input, shape index: {}]
  %s3 = inlined_call_operand.vmem [shape: f32[8,1], index: 3, kind: input, shape index: {}]
  %s4 = inlined_call_operand.vmem [shape: f32[8,72], index: 4, kind: input, shape index: {}]
  %s5 = inlined_call_operand.vmem [shape: f32[8,1], index: 5, kind: input, shape index: {}]
  %s6 = inlined_call_operand.vmem [shape: f32[2,8,256], index: 6, kind: output, shape index: {0}]
  %s7 = inlined_call_operand.vmem [shape: f32[2,8,8,8], index: 7, kind: output, shape index: {1}]
  %8 = xla_tuple %s6, %s7
  %s9 = sld [smem:[#allocation0]]
  $region65: #{downsample_block_forward.1} parent=0
    _
  %s11 = ssub.s32 1, %s9
  %s12 = scalar_select 0, %s11, %s9
  loop: start=0, step=1, limit=4
  $region2: #{downsample_block_forward.1} parent=0 // loop_pre_header
    _
  $region3: #{downsample_block_forward.1} parent=0 // loop_header
    %s14 = sphi 0, %s18
    %p15 = scmp.ge.s32.totalorder %s14, 4
    %s24 = sphi 0, %s26
    %s27 = sphi 0, %s24
    %s28 = sphi 0, %s27
    %s44 = sphi 0, %s28
    %s48 = sphi 0, %s48
    %s50 = sphi 0, %s48
    %s51 = sphi 0, %s50
    %s65 = sphi 0, %s51
    %s69 = sphi 0, %s69
    %s71 = sphi 0, %s69
    %s72 = sphi 0, %s71
    %s86 = sphi 0, %s72
    %s90 = sphi 0, %s90
    %s92 = sphi 0, %s90
    %s93 = sphi 0, %s92
    %s107 = sphi 0, %s93
    %s111 = sphi 0, %s111
    %s113 = sphi 0, %s111
    %s114 = sphi 0, %s113
    %s128 = sphi 0, %s114
    %s132 = sphi 0, %s132
    %s134 = sphi 0, %s132
    %s135 = sphi 0, %s134
    %s149 = sphi 0, %s135
    %s155 = sphi 0, %s157
    %s158 = sphi 0, %s155
    %s159 = sphi 0, %s158
    %s175 = sphi 0, %s159
    %s181 = sphi 0, %s183
    %s184 = sphi 0, %s181
    %s185 = sphi 0, %s184
    %s201 = sphi 0, %s185
  $region4: #{downsample_block_forward.1} parent=0 // loop_header_branch
    %17 = sbr.rel (%p15) target = $region8
  $region5: #{downsample_block_forward.1} parent=0 // loop_body
    %s19 = ssub.s32 %s14, 1
    %s20 = ssub.s32 %s14, 2
    %s21 = sadd.s32 %s14, 1
    %s22 = ssub.s32 %s14, %s21
    %p23 = scmp.eq.s32.totalorder %s22, 0
    %s25 = sadd.s32 %s24, 1
    %s26 = scalar_select %p23, %s24, %s25
    %p29 = pneg %p23
    %p30 = scmp.eq.s32.totalorder %s14, 1
    %p31 = por %p29, %p30
    %p32 = scmp.ne.s32.totalorder %s24, %s27
    %p33 = scmp.eq.s32.totalorder %s14, 0
    %p34 = por %p32, %p33
    %p35 = scmp.ne.s32.totalorder %s24, %s27
    %p36 = scmp.eq.s32.totalorder %s19, 1
    %p37 = por %p35, %p36
    %p38 = scmp.ne.s32.totalorder %s27, %s28
    %p39 = scmp.eq.s32.totalorder %s19, 0
    %p40 = por %p38, %p39
    %p41 = scmp.ne.s32.totalorder %s27, %s28
    %p42 = scmp.eq.s32.totalorder %s20, 1
    %p43 = por %p41, %p42
    %p45 = scmp.ne.s32.totalorder %s28, %s44
    %p46 = scmp.eq.s32.totalorder %s20, 0
    %p47 = por %p45, %p46
    %s49 = sadd.s32 %s48, 1
    %p52 = scmp.eq.s32.totalorder %s14, 1
    %p53 = scmp.ne.s32.totalorder %s48, %s50
    %p54 = scmp.eq.s32.totalorder %s14, 0
    %p55 = por %p53, %p54
    %p56 = scmp.ne.s32.totalorder %s48, %s50
    %p57 = scmp.eq.s32.totalorder %s19, 1
    %p58 = por %p56, %p57
    %p59 = scmp.ne.s32.totalorder %s50, %s51
    %p60 = scmp.eq.s32.totalorder %s19, 0
    %p61 = por %p59, %p60
    %p62 = scmp.ne.s32.totalorder %s50, %s51
    %p63 = scmp.eq.s32.totalorder %s20, 1
    %p64 = por %p62, %p63
    %p66 = scmp.ne.s32.totalorder %s51, %s65
    %p67 = scmp.eq.s32.totalorder %s20, 0
    %p68 = por %p66, %p67
    %s70 = sadd.s32 %s69, 1
    %p73 = scmp.eq.s32.totalorder %s14, 1
    %p74 = scmp.ne.s32.totalorder %s69, %s71
    %p75 = scmp.eq.s32.totalorder %s14, 0
    %p76 = por %p74, %p75
    %p77 = scmp.ne.s32.totalorder %s69, %s71
    %p78 = scmp.eq.s32.totalorder %s19, 1
    %p79 = por %p77, %p78
    %p80 = scmp.ne.s32.totalorder %s71, %s72
    %p81 = scmp.eq.s32.totalorder %s19, 0
    %p82 = por %p80, %p81
    %p83 = scmp.ne.s32.totalorder %s71, %s72
    %p84 = scmp.eq.s32.totalorder %s20, 1
    %p85 = por %p83, %p84
    %p87 = scmp.ne.s32.totalorder %s72, %s86
    %p88 = scmp.eq.s32.totalorder %s20, 0
    %p89 = por %p87, %p88
    %s91 = sadd.s32 %s90, 1
    %p94 = scmp.eq.s32.totalorder %s14, 1
    %p95 = scmp.ne.s32.totalorder %s90, %s92
    %p96 = scmp.eq.s32.totalorder %s14, 0
    %p97 = por %p95, %p96
    %p98 = scmp.ne.s32.totalorder %s90, %s92
    %p99 = scmp.eq.s32.totalorder %s19, 1
    %p100 = por %p98, %p99
    %p101 = scmp.ne.s32.totalorder %s92, %s93
    %p102 = scmp.eq.s32.totalorder %s19, 0
    %p103 = por %p101, %p102
    %p104 = scmp.ne.s32.totalorder %s92, %s93
    %p105 = scmp.eq.s32.totalorder %s20, 1
    %p106 = por %p104, %p105
    %p108 = scmp.ne.s32.totalorder %s93, %s107
    %p109 = scmp.eq.s32.totalorder %s20, 0
    %p110 = por %p108, %p109
    %s112 = sadd.s32 %s111, 1
    %p115 = scmp.eq.s32.totalorder %s14, 1
    %p116 = scmp.ne.s32.totalorder %s111, %s113
    %p117 = scmp.eq.s32.totalorder %s14, 0
    %p118 = por %p116, %p117
    %p119 = scmp.ne.s32.totalorder %s111, %s113
    %p120 = scmp.eq.s32.totalorder %s19, 1
    %p121 = por %p119, %p120
    %p122 = scmp.ne.s32.totalorder %s113, %s114
    %p123 = scmp.eq.s32.totalorder %s19, 0
    %p124 = por %p122, %p123
    %p125 = scmp.ne.s32.totalorder %s113, %s114
    %p126 = scmp.eq.s32.totalorder %s20, 1
    %p127 = por %p125, %p126
    %p129 = scmp.ne.s32.totalorder %s114, %s128
    %p130 = scmp.eq.s32.totalorder %s20, 0
    %p131 = por %p129, %p130
    %s133 = sadd.s32 %s132, 1
    %p136 = scmp.eq.s32.totalorder %s14, 1
    %p137 = scmp.ne.s32.totalorder %s132, %s134
    %p138 = scmp.eq.s32.totalorder %s14, 0
    %p139 = por %p137, %p138
    %p140 = scmp.ne.s32.totalorder %s132, %s134
    %p141 = scmp.eq.s32.totalorder %s19, 1
    %p142 = por %p140, %p141
    %p143 = scmp.ne.s32.totalorder %s134, %s135
    %p144 = scmp.eq.s32.totalorder %s19, 0
    %p145 = por %p143, %p144
    %p146 = scmp.ne.s32.totalorder %s134, %s135
    %p147 = scmp.eq.s32.totalorder %s20, 1
    %p148 = por %p146, %p147
    %p150 = scmp.ne.s32.totalorder %s135, %s149
    %p151 = scmp.eq.s32.totalorder %s20, 0
    %p152 = por %p150, %p151
    %s153 = ssub.s32 %s14, %s21
    %p154 = scmp.eq.s32.totalorder %s153, 0
    %s156 = sadd.s32 %s155, 1
    %s157 = scalar_select %p154, %s155, %s156
    %p160 = pneg %p154
    %p161 = scmp.eq.s32.totalorder %s14, 1
    %p162 = por %p160, %p161
    %p163 = scmp.ne.s32.totalorder %s155, %s158
    %p164 = scmp.eq.s32.totalorder %s14, 0
    %p165 = por %p163, %p164
    %p166 = scmp.ne.s32.totalorder %s155, %s158
    %p167 = scmp.eq.s32.totalorder %s19, 1
    %p168 = por %p166, %p167
    %p169 = scmp.ne.s32.totalorder %s158, %s159
    %p170 = scmp.eq.s32.totalorder %s19, 0
    %p171 = por %p169, %p170
    %p172 = scmp.ne.s32.totalorder %s158, %s159
    %p173 = scmp.eq.s32.totalorder %s20, 1
    %p174 = por %p172, %p173
    %p176 = scmp.ne.s32.totalorder %s159, %s175
    %p177 = scmp.eq.s32.totalorder %s20, 0
    %p178 = por %p176, %p177
    %s179 = ssub.s32 %s14, %s21
    %p180 = scmp.eq.s32.totalorder %s179, 0
    %s182 = sadd.s32 %s181, 1
    %s183 = scalar_select %p180, %s181, %s182
    %p186 = pneg %p180
    %p187 = scmp.eq.s32.totalorder %s14, 1
    %p188 = por %p186, %p187
    %p189 = scmp.ne.s32.totalorder %s181, %s184
    %p190 = scmp.eq.s32.totalorder %s14, 0
    %p191 = por %p189, %p190
    %p192 = scmp.ne.s32.totalorder %s181, %s184
    %p193 = scmp.eq.s32.totalorder %s19, 1
    %p194 = por %p192, %p193
    %p195 = scmp.ne.s32.totalorder %s184, %s185
    %p196 = scmp.eq.s32.totalorder %s19, 0
    %p197 = por %p195, %p196
    %p198 = scmp.ne.s32.totalorder %s184, %s185
    %p199 = scmp.eq.s32.totalorder %s20, 1
    %p200 = por %p198, %p199
    %p202 = scmp.ne.s32.totalorder %s185, %s201
    %p203 = scmp.eq.s32.totalorder %s20, 0
    %p204 = por %p202, %p203
    %p205 = scmp.le.s32.totalorder 1, %s14
    %p206 = scmp.lt.s32.totalorder %s14, 3
    %p207 = pnand %p205, %p206
    %p208 = pneg %p207
    // Predicated region
    $region9: #{downsample_block_forward.1} parent=5 // pred_check
      _
    $region10: #{downsample_block_forward.1} parent=5 // pred_check_branch
      %210 = sbr.rel (%p207) target = $region12
    $region11: #{downsample_block_forward.1} parent=5 // pred_region
      %s211 = ssub.s32 %s14, 1
      // Predicated region
      $region13: #{downsample_block_forward.1} parent=11 // pred_check
        %p212 = pneg %p61
      $region14: #{downsample_block_forward.1} parent=11 // pred_check_branch
        %214 = sbr.rel (%p212) target = $region16
      $region15: #{downsample_block_forward.1} parent=11 // pred_region
        _
      $region16: #{downsample_block_forward.1} parent=11 // pred_fallthru
        _
      // Predicated region
      $region17: #{downsample_block_forward.1} parent=11 // pred_check
        %p215 = pneg %p82
      $region18: #{downsample_block_forward.1} parent=11 // pred_check_branch
        %217 = sbr.rel (%p215) target = $region20
      $region19: #{downsample_block_forward.1} parent=11 // pred_region
        _
      $region20: #{downsample_block_forward.1} parent=11 // pred_fallthru
        _
      // Predicated region
      $region21: #{downsample_block_forward.1} parent=11 // pred_check
        %p218 = pneg %p103
      $region22: #{downsample_block_forward.1} parent=11 // pred_check_branch
        %220 = sbr.rel (%p218) target = $region24
      $region23: #{downsample_block_forward.1} parent=11 // pred_region
        _
      $region24: #{downsample_block_forward.1} parent=11 // pred_fallthru
        _
      // Predicated region
      $region25: #{downsample_block_forward.1} parent=11 // pred_check
        %p221 = pneg %p124
      $region26: #{downsample_block_forward.1} parent=11 // pred_check_branch
        %223 = sbr.rel (%p221) target = $region28
      $region27: #{downsample_block_forward.1} parent=11 // pred_region
        _
      $region28: #{downsample_block_forward.1} parent=11 // pred_fallthru
        _
      // Predicated region
      $region29: #{downsample_block_forward.1} parent=11 // pred_check
        %p224 = pneg %p145
      $region30: #{downsample_block_forward.1} parent=11 // pred_check_branch
        %226 = sbr.rel (%p224) target = $region32
      $region31: #{downsample_block_forward.1} parent=11 // pred_region
        _
      $region32: #{downsample_block_forward.1} parent=11 // pred_fallthru
        _
    $region12: #{downsample_block_forward.1} parent=5 // pred_fallthru
      _
    %p227 = scmp.lt.s32.totalorder %s14, 2
    // Predicated region
    $region33: #{downsample_block_forward.1} parent=5 // pred_check
      %p228 = pneg %p227
    $region34: #{downsample_block_forward.1} parent=5 // pred_check_branch
      %230 = sbr.rel (%p228) target = $region36
    $region35: #{downsample_block_forward.1} parent=5 // pred_region
      // Predicated region
      $region37: #{downsample_block_forward.1} parent=35 // pred_check
        %p231 = pneg %p34
      $region38: #{downsample_block_forward.1} parent=35 // pred_check_branch
        %233 = sbr.rel (%p231) target = $region40
      $region39: #{downsample_block_forward.1} parent=35 // pred_region
        %p234 = scmp.lt.s32.totalorder %s14, 1
        %s235 = scalar_select %p234, %s14, 1
        %s236 = smul.addr %s235, 2
        %s237 = smul.addr %s236, 8
        %s238 = scalar_lea.vmem %s0, %s237
      $region40: #{downsample_block_forward.1} parent=35 // pred_fallthru
        _
    $region36: #{downsample_block_forward.1} parent=5 // pred_fallthru
      _
    %p239 = scmp.le.s32.totalorder 1, %s14
    %p240 = scmp.lt.s32.totalorder %s14, 3
    %p241 = pnand %p239, %p240
    %p242 = pneg %p241
    // Predicated region
    $region41: #{downsample_block_forward.1} parent=5 // pred_check
      _
    $region42: #{downsample_block_forward.1} parent=5 // pred_check_branch
      %244 = sbr.rel (%p241) target = $region44
    $region43: #{downsample_block_forward.1} parent=5 // pred_region
      %s245 = ssub.s32 %s14, 1
      %p246 = scmp.lt.s32.totalorder %s19, 1
      %s247 = scalar_select %p246, %s19, 1
      %s248 = smul.addr %s247, 2
      %s249 = smul.addr %s248, 8
      %s250 = scalar_lea.vmem %s0, %s249
      %p251 = pneg %p40
      %p252 = pneg %p37
      %p253 = pneg %p61
      %p254 = pneg %p58
      %p255 = pneg %p82
      %p256 = pneg %p79
      %p257 = pneg %p103
      %p258 = pneg %p100
      %p259 = pneg %p124
      %p260 = pneg %p121
      %p261 = pneg %p145
      %p262 = pneg %p142
      %p263 = pneg %p171
      %p264 = pneg %p168
      %p265 = scmp.lt.s32.totalorder %s19, 1
      %s266 = scalar_select %p265, %s19, 1
      %s267 = smul.addr %s266, 2
      %s268 = smul.addr %s267, 8
      %s269 = scalar_lea.vmem %s6, %s268
      %p270 = pneg %p197
      %p271 = pneg %p194
      %p272 = scmp.lt.s32.totalorder %s19, 1
      %s273 = scalar_select %p272, %s19, 1
      %s274 = smul.addr %s273, 8
      %s275 = smul.addr %s274, 8
      %s276 = scalar_lea.vmem %s7, %s275
      %p277 = scmp.lt.s32.totalorder %s19, 1
      %s278 = scalar_select %p277, %s19, 1
      %s279 = smul.addr %s278, 2
      %s280 = smul.addr %s279, 8
      %s281 = scalar_lea.vmem %s0, %s280
      %p282 = scmp.lt.s32.totalorder %s19, 1
      %s283 = scalar_select %p282, %s19, 1
      %s284 = smul.addr %s283, 2
      %s285 = smul.addr %s284, 8
      %s286 = scalar_lea.vmem %s6, %s285
      %p287 = scmp.lt.s32.totalorder %s19, 1
      %s288 = scalar_select %p287, %s19, 1
      %s289 = smul.addr %s288, 8
      %s290 = smul.addr %s289, 8
      %s291 = scalar_lea.vmem %s7, %s290
      %v292 = vld [vmem:[%s281] sm:$0xff]
      %v293 = vld [vmem:[%s281 + $0x8] sm:$0xff]
      %294 = vrot.lane.b32.xlu0 %v292, 17
      %v295 = vpop.permute.xlu0 %294
      %296 = vrot.lane.b32.xlu0 %v293, 17
      %v297 = vpop.permute.xlu0 %296
      %v298 = vlaneseq
      %v299 = vand.u32 %v298, 127
      %vm300 = vcmp.lt.s32.totalorder %v299, 17
      %v301 = vsel %vm300, %v295, %v297
      %v302 = vsel %vm300, %v297, %v295
      %v303 = vld [vmem:[%s1] sm:$0x3]
      %v305 = vlaneseq
      %v306 = vshrl.u32 %v305, 7
      %v307 = vsub.s32 0, %v306
      %v308 = vrot.slane %v303, %v307
      %v309 = vlaneseq
      %v310 = vshrl.u32 %v309, 7
      %v311 = vsub.s32 1, %v310
      %v312 = vrot.slane %v303, %v311
      %v315 = vmul.f32 %v302, %v308
      %v316 = vmul.f32 %v301, %v312
      %317 = vrot.lane.b32.xlu0 %v292, 16
      %v318 = vpop.permute.xlu0 %317
      %319 = vrot.lane.b32.xlu0 %v293, 16
      %v320 = vpop.permute.xlu0 %319
      %vm321 = vcmp.lt.s32.totalorder %v299, 16
      %v322 = vsel %vm321, %v318, %v320
      %v323 = vsel %vm321, %v320, %v318
      %s324 = scalar_lea.vmem %s1, 2
      %v325 = vld [vmem:[%s324] sm:$0x3]
      %v327 = vlaneseq
      %v328 = vshrl.u32 %v327, 7
      %v329 = vsub.s32 0, %v328
      %v330 = vrot.slane %v325, %v329
      %v331 = vlaneseq
      %v332 = vshrl.u32 %v331, 7
      %v333 = vsub.s32 1, %v332
      %v334 = vrot.slane %v325, %v333
      %v337 = vmul.f32 %v323, %v330
      %v338 = vmul.f32 %v322, %v334
      %339 = vrot.lane.b32.xlu0 %v292, 15
      %v340 = vpop.permute.xlu0 %339
      %341 = vrot.lane.b32.xlu0 %v293, 15
      %v342 = vpop.permute.xlu0 %341
      %vm343 = vcmp.lt.s32.totalorder %v299, 15
      %v344 = vsel %vm343, %v340, %v342
      %v345 = vsel %vm343, %v342, %v340
      %s346 = scalar_lea.vmem %s1, 4
      %v347 = vld [vmem:[%s346] sm:$0x3]
      %v349 = vlaneseq
      %v350 = vshrl.u32 %v349, 7
      %v351 = vsub.s32 0, %v350
      %v352 = vrot.slane %v347, %v351
      %v353 = vlaneseq
      %v354 = vshrl.u32 %v353, 7
      %v355 = vsub.s32 1, %v354
      %v356 = vrot.slane %v347, %v355
      %v359 = vmul.f32 %v345, %v352
      %v360 = vmul.f32 %v344, %v356
      %361 = vrot.lane.b32.xlu0 %v292, 1
      %v362 = vpop.permute.xlu0 %361
      %363 = vrot.lane.b32.xlu0 %v293, 1
      %v364 = vpop.permute.xlu0 %363
      %vm365 = vcmp.lt.s32.totalorder %v299, 1
      %v366 = vsel %vm365, %v362, %v364
      %v367 = vsel %vm365, %v364, %v362
      %s368 = scalar_lea.vmem %s1, 6
      %v369 = vld [vmem:[%s368] sm:$0x3]
      %v371 = vlaneseq
      %v372 = vshrl.u32 %v371, 7
      %v373 = vsub.s32 0, %v372
      %v374 = vrot.slane %v369, %v373
      %v375 = vlaneseq
      %v376 = vshrl.u32 %v375, 7
      %v377 = vsub.s32 1, %v376
      %v378 = vrot.slane %v369, %v377
      %v381 = vmul.f32 %v367, %v374
      %v382 = vmul.f32 %v366, %v378
      %383 = vrot.lane.b32.xlu0 %v292, 127
      %v384 = vpop.permute.xlu0 %383
      %385 = vrot.lane.b32.xlu0 %v293, 127
      %v386 = vpop.permute.xlu0 %385
      %vm387 = vcmp.lt.s32.totalorder %v299, 127
      %v388 = vsel %vm387, %v384, %v386
      %v389 = vsel %vm387, %v386, %v384
      %s390 = scalar_lea.vmem %s1, 10
      %v391 = vld [vmem:[%s390] sm:$0x3]
      %v393 = vlaneseq
      %v394 = vshrl.u32 %v393, 7
      %v395 = vsub.s32 0, %v394
      %v396 = vrot.slane %v391, %v395
      %v397 = vlaneseq
      %v398 = vshrl.u32 %v397, 7
      %v399 = vsub.s32 1, %v398
      %v400 = vrot.slane %v391, %v399
      %v403 = vmul.f32 %v388, %v396
      %v404 = vmul.f32 %v389, %v400
      %405 = vrot.lane.b32.xlu0 %v292, 113
      %v406 = vpop.permute.xlu0 %405
      %407 = vrot.lane.b32.xlu0 %v293, 113
      %v408 = vpop.permute.xlu0 %407
      %vm409 = vcmp.lt.s32.totalorder %v299, 113
      %v410 = vsel %vm409, %v406, %v408
      %v411 = vsel %vm409, %v408, %v406
      %s412 = scalar_lea.vmem %s1, 12
      %v413 = vld [vmem:[%s412] sm:$0x3]
      %v415 = vlaneseq
      %v416 = vshrl.u32 %v415, 7
      %v417 = vsub.s32 0, %v416
      %v418 = vrot.slane %v413, %v417
      %v419 = vlaneseq
      %v420 = vshrl.u32 %v419, 7
      %v421 = vsub.s32 1, %v420
      %v422 = vrot.slane %v413, %v421
      %v425 = vmul.f32 %v410, %v418
      %v426 = vmul.f32 %v411, %v422
      %427 = vrot.lane.b32.xlu0 %v292, 112
      %v428 = vpop.permute.xlu0 %427
      %429 = vrot.lane.b32.xlu0 %v293, 112
      %v430 = vpop.permute.xlu0 %429
      %vm431 = vcmp.lt.s32.totalorder %v299, 112
      %v432 = vsel %vm431, %v428, %v430
      %v433 = vsel %vm431, %v430, %v428
      %s434 = scalar_lea.vmem %s1, 14
      %v435 = vld [vmem:[%s434] sm:$0x3]
      %v437 = vlaneseq
      %v438 = vshrl.u32 %v437, 7
      %v439 = vsub.s32 0, %v438
      %v440 = vrot.slane %v435, %v439
      %v441 = vlaneseq
      %v442 = vshrl.u32 %v441, 7
      %v443 = vsub.s32 1, %v442
      %v444 = vrot.slane %v435, %v443
      %v447 = vmul.f32 %v432, %v440
      %v448 = vmul.f32 %v433, %v444
      %449 = vrot.lane.b32.xlu0 %v292, 111
      %v450 = vpop.permute.xlu0 %449
      %451 = vrot.lane.b32.xlu0 %v293, 111
      %v452 = vpop.permute.xlu0 %451
      %vm453 = vcmp.lt.s32.totalorder %v299, 111
      %v454 = vsel %vm453, %v450, %v452
      %v455 = vsel %vm453, %v452, %v450
      %s456 = scalar_lea.vmem %s1, 16
      %v457 = vld [vmem:[%s456] sm:$0x3]
      %v459 = vlaneseq
      %v460 = vshrl.u32 %v459, 7
      %v461 = vsub.s32 0, %v460
      %v462 = vrot.slane %v457, %v461
      %v463 = vlaneseq
      %v464 = vshrl.u32 %v463, 7
      %v465 = vsub.s32 1, %v464
      %v466 = vrot.slane %v457, %v465
      %v469 = vmul.f32 %v454, %v462
      %v470 = vmul.f32 %v455, %v466
      %v471 = vld [vmem:[%s2] sm:$0xff]
      %v472 = vld [vmem:[%s3] sm:$0xff]
      %474 = vset.pattern.permute.xlu0 0
      %475 = vperm.xlu0 %474, %v472
      %v476 = vpop.permute.xlu0 %475
      %vm478 = vcmask 588800
      %v480 = vsel %vm478, %v471, 0
      %482 = vmatprep.subr.mxu0 0.0
      %483 = vmatpush1.msra.mxu0 0.0
      %484 = vmatprep.subr.mxu0 0.0
      %485 = vmatpush1.msra.mxu0 0.0
      %486 = vmatprep.subr.mxu0 0.0
      %487 = vmatpush1.msra.mxu0 0.0
      %488 = vmatprep.subr.mxu0 0.0
      %489 = vmatpush1.msra.mxu0 0.0
      %490 = vmatprep.subr.mxu0 0.0
      %491 = vmatpush1.msra.mxu0 0.0
      %492 = vmatprep.subr.mxu0 0.0
      %493 = vmatpush1.msra.mxu0 0.0
      %494 = vmatprep.subr.mxu0 0.0
      %495 = vmatpush1.msra.mxu0 0.0
      %496 = vmatprep.subr.mxu0 %v470
      %497 = vmatpush1.msra.mxu0 %v469
      %498 = vmatprep.subr.mxu0 %v448
      %499 = vmatpush1.msra.mxu0 %v447
      %500 = vmatprep.subr.mxu0 %v426
      %501 = vmatpush1.msra.mxu0 %v425
      %502 = vmatprep.subr.mxu0 %v404
      %503 = vmatpush1.msra.mxu0 %v403
      %504 = vmatprep.subr.mxu0 %v293
      %505 = vmatpush1.msra.mxu0 %v292
      %506 = vmatprep.subr.mxu0 %v382
      %507 = vmatpush1.msra.mxu0 %v381
      %508 = vmatprep.subr.mxu0 %v360
      %509 = vmatpush1.msra.mxu0 %v359
      %510 = vmatprep.subr.mxu0 %v338
      %511 = vmatpush1.msra.mxu0 %v337
      %512 = vmatprep.subr.mxu0 %v316
      %513 = vmatpush1.msra.mxu0 %v315
      %514 = vmatprep.subr.mxu0 0.0
      %515 = vmatpush2.msra.mxu0 0.0
      %516 = vmatprep.subr.mxu0 0.0
      %517 = vmatpush2.msra.mxu0 0.0
      %518 = vmatprep.subr.mxu0 0.0
      %519 = vmatpush2.msra.mxu0 0.0
      %520 = vmatprep.subr.mxu0 0.0
      %521 = vmatpush2.msra.mxu0 0.0
      %522 = vmatprep.subr.mxu0 0.0
      %523 = vmatpush2.msra.mxu0 0.0
      %524 = vmatprep.subr.mxu0 0.0
      %525 = vmatpush2.msra.mxu0 0.0
      %526 = vmatprep.subr.mxu0 0.0
      %527 = vmatpush2.msra.mxu0 0.0
      %528 = vmatprep.subr.mxu0 0.0
      %529 = vmatpush2.msra.mxu0 0.0
      %530 = vmatprep.subr.mxu0 0.0
      %531 = vmatpush2.msra.mxu0 0.0
      %532 = vmatprep.subr.mxu0 0.0
      %533 = vmatpush2.msra.mxu0 0.0
      %534 = vmatprep.subr.mxu0 0.0
      %535 = vmatpush2.msra.mxu0 0.0
      %536 = vmatprep.subr.mxu0 0.0
      %537 = vmatpush2.msra.mxu0 0.0
      %538 = vmatprep.subr.mxu0 0.0
      %539 = vmatpush2.msra.mxu0 0.0
      %540 = vmatprep.subr.mxu0 0.0
      %541 = vmatpush2.msra.mxu0 0.0
      %542 = vmatprep.subr.mxu0 0.0
      %543 = vmatpush2.msra.mxu0 0.0
      %544 = vmatprep.subr.mxu0 0.0
      %545 = vmatpush2.msra.mxu0 0.0
      %546 = vmatprep.mubr.f32.mxu0 0.0
      %547 = vmatmul.mubr.f32.gmra.mxu0 %v480
      %v548 = vpop.f32.mrf.mxu0
      %v549 = vadd.f32 %v476, %v548
      %v550 = vpop.f32.mrf.mxu0
      %v551 = vadd.f32 %v476, %v550
      %552 = vdwg.mxu0
      %v553 = vmax.f32 %v549, 0.0
      %v554 = vmax.f32 %v551, 0.0
      %555 = vrot.lane.b32.xlu0 %v553, 17
      %v556 = vpop.permute.xlu0 %555
      %557 = vrot.lane.b32.xlu0 %v554, 17
      %v558 = vpop.permute.xlu0 %557
      %v559 = vsel %vm300, %v556, %v558
      %v560 = vsel %vm300, %v558, %v556
      %v561 = vmul.f32 %v560, %v308
      %v562 = vmul.f32 %v559, %v312
      %563 = vrot.lane.b32.xlu0 %v553, 16
      %v564 = vpop.permute.xlu0 %563
      %565 = vrot.lane.b32.xlu0 %v554, 16
      %v566 = vpop.permute.xlu0 %565
      %v567 = vsel %vm321, %v564, %v566
      %v568 = vsel %vm321, %v566, %v564
      %v569 = vmul.f32 %v568, %v330
      %v570 = vmul.f32 %v567, %v334
      %571 = vrot.lane.b32.xlu0 %v553, 15
      %v572 = vpop.permute.xlu0 %571
      %573 = vrot.lane.b32.xlu0 %v554, 15
      %v574 = vpop.permute.xlu0 %573
      %v575 = vsel %vm343, %v572, %v574
      %v576 = vsel %vm343, %v574, %v572
      %v577 = vmul.f32 %v576, %v352
      %v578 = vmul.f32 %v575, %v356
      %579 = vrot.lane.b32.xlu0 %v553, 1
      %v580 = vpop.permute.xlu0 %579
      %581 = vrot.lane.b32.xlu0 %v554, 1
      %v582 = vpop.permute.xlu0 %581
      %v583 = vsel %vm365, %v580, %v582
      %v584 = vsel %vm365, %v582, %v580
      %v585 = vmul.f32 %v584, %v374
      %v586 = vmul.f32 %v583, %v378
      %587 = vrot.lane.b32.xlu0 %v553, 127
      %v588 = vpop.permute.xlu0 %587
      %589 = vrot.lane.b32.xlu0 %v554, 127
      %v590 = vpop.permute.xlu0 %589
      %v591 = vsel %vm387, %v588, %v590
      %v592 = vsel %vm387, %v590, %v588
      %v593 = vmul.f32 %v591, %v396
      %v594 = vmul.f32 %v592, %v400
      %595 = vrot.lane.b32.xlu0 %v553, 113
      %v596 = vpop.permute.xlu0 %595
      %597 = vrot.lane.b32.xlu0 %v554, 113
      %v598 = vpop.permute.xlu0 %597
      %v599 = vsel %vm409, %v596, %v598
      %v600 = vsel %vm409, %v598, %v596
      %v601 = vmul.f32 %v599, %v418
      %v602 = vmul.f32 %v600, %v422
      %603 = vrot.lane.b32.xlu0 %v553, 112
      %v604 = vpop.permute.xlu0 %603
      %605 = vrot.lane.b32.xlu0 %v554, 112
      %v606 = vpop.permute.xlu0 %605
      %v607 = vsel %vm431, %v604, %v606
      %v608 = vsel %vm431, %v606, %v604
      %v609 = vmul.f32 %v607, %v440
      %v610 = vmul.f32 %v608, %v444
      %611 = vrot.lane.b32.xlu0 %v553, 111
      %v612 = vpop.permute.xlu0 %611
      %613 = vrot.lane.b32.xlu0 %v554, 111
      %v614 = vpop.permute.xlu0 %613
      %v615 = vsel %vm453, %v612, %v614
      %v616 = vsel %vm453, %v614, %v612
      %v617 = vmul.f32 %v615, %v462
      %v618 = vmul.f32 %v616, %v466
      %v619 = vld [vmem:[%s4] sm:$0xff]
      %v620 = vld [vmem:[%s5] sm:$0xff]
      %622 = vset.pattern.permute.xlu0 0
      %623 = vperm.xlu0 %622, %v620
      %v624 = vpop.permute.xlu0 %623
      %v627 = vsel %vm478, %v619, 0
      %629 = vmatprep.subr.mxu0 0.0
      %630 = vmatpush1.msra.mxu0 0.0
      %631 = vmatprep.subr.mxu0 0.0
      %632 = vmatpush1.msra.mxu0 0.0
      %633 = vmatprep.subr.mxu0 0.0
      %634 = vmatpush1.msra.mxu0 0.0
      %635 = vmatprep.subr.mxu0 0.0
      %636 = vmatpush1.msra.mxu0 0.0
      %637 = vmatprep.subr.mxu0 0.0
      %638 = vmatpush1.msra.mxu0 0.0
      %639 = vmatprep.subr.mxu0 0.0
      %640 = vmatpush1.msra.mxu0 0.0
      %641 = vmatprep.subr.mxu0 0.0
      %642 = vmatpush1.msra.mxu0 0.0
      %643 = vmatprep.subr.mxu0 %v618
      %644 = vmatpush1.msra.mxu0 %v617
      %645 = vmatprep.subr.mxu0 %v610
      %646 = vmatpush1.msra.mxu0 %v609
      %647 = vmatprep.subr.mxu0 %v602
      %648 = vmatpush1.msra.mxu0 %v601
      %649 = vmatprep.subr.mxu0 %v594
      %650 = vmatpush1.msra.mxu0 %v593
      %651 = vmatprep.subr.mxu0 %v554
      %652 = vmatpush1.msra.mxu0 %v553
      %653 = vmatprep.subr.mxu0 %v586
      %654 = vmatpush1.msra.mxu0 %v585
      %655 = vmatprep.subr.mxu0 %v578
      %656 = vmatpush1.msra.mxu0 %v577
      %657 = vmatprep.subr.mxu0 %v570
      %658 = vmatpush1.msra.mxu0 %v569
      %659 = vmatprep.subr.mxu0 %v562
      %660 = vmatpush1.msra.mxu0 %v561
      %661 = vmatprep.subr.mxu0 0.0
      %662 = vmatpush2.msra.mxu0 0.0
      %663 = vmatprep.subr.mxu0 0.0
      %664 = vmatpush2.msra.mxu0 0.0
      %665 = vmatprep.subr.mxu0 0.0
      %666 = vmatpush2.msra.mxu0 0.0
      %667 = vmatprep.subr.mxu0 0.0
      %668 = vmatpush2.msra.mxu0 0.0
      %669 = vmatprep.subr.mxu0 0.0
      %670 = vmatpush2.msra.mxu0 0.0
      %671 = vmatprep.subr.mxu0 0.0
      %672 = vmatpush2.msra.mxu0 0.0
      %673 = vmatprep.subr.mxu0 0.0
      %674 = vmatpush2.msra.mxu0 0.0
      %675 = vmatprep.subr.mxu0 0.0
      %676 = vmatpush2.msra.mxu0 0.0
      %677 = vmatprep.subr.mxu0 0.0
      %678 = vmatpush2.msra.mxu0 0.0
      %679 = vmatprep.subr.mxu0 0.0
      %680 = vmatpush2.msra.mxu0 0.0
      %681 = vmatprep.subr.mxu0 0.0
      %682 = vmatpush2.msra.mxu0 0.0
      %683 = vmatprep.subr.mxu0 0.0
      %684 = vmatpush2.msra.mxu0 0.0
      %685 = vmatprep.subr.mxu0 0.0
      %686 = vmatpush2.msra.mxu0 0.0
      %687 = vmatprep.subr.mxu0 0.0
      %688 = vmatpush2.msra.mxu0 0.0
      %689 = vmatprep.subr.mxu0 0.0
      %690 = vmatpush2.msra.mxu0 0.0
      %691 = vmatprep.subr.mxu0 0.0
      %692 = vmatpush2.msra.mxu0 0.0
      %693 = vmatprep.mubr.f32.mxu0 0.0
      %694 = vmatmul.mubr.f32.gmra.mxu0 %v627
      %v695 = vpop.f32.mrf.mxu0
      %v696 = vadd.f32 %v624, %v695
      %v697 = vpop.f32.mrf.mxu0
      %v698 = vadd.f32 %v624, %v697
      %699 = vdwg.mxu0
      %v700 = vmax.f32 %v696, 0.0
      %v701 = vmax.f32 %v698, 0.0
      %702 = vst [vmem:[%s286] sm:$0xff] %v700
      %703 = vst [vmem:[%s286 + $0x8] sm:$0xff] %v701
      %704 = vxpose.xlu0.b32.start [1/16] %v700, 128
      %705 = vxpose.xlu0.b32.cont [2/16] 0.0, 128
      %706 = vxpose.xlu0.b32.cont [3/16] 0.0, 128
      %707 = vxpose.xlu0.b32.cont [4/16] 0.0, 128
      %708 = vxpose.xlu0.b32.cont [5/16] 0.0, 128
      %709 = vxpose.xlu0.b32.cont [6/16] 0.0, 128
      %710 = vxpose.xlu0.b32.cont [7/16] 0.0, 128
      %711 = vxpose.xlu0.b32.cont [8/16] 0.0, 128
      %712 = vxpose.xlu0.b32.cont [9/16] 0.0, 128
      %713 = vxpose.xlu0.b32.cont [10/16] 0.0, 128
      %714 = vxpose.xlu0.b32.cont [11/16] 0.0, 128
      %715 = vxpose.xlu0.b32.cont [12/16] 0.0, 128
      %716 = vxpose.xlu0.b32.cont [13/16] 0.0, 128
      %717 = vxpose.xlu0.b32.cont [14/16] 0.0, 128
      %718 = vxpose.xlu0.b32.cont [15/16] 0.0, 128
      %719 = vxpose.xlu0.b32.end [16/16] 0.0, 128
      %v720 = vpop.trf.xlu0
      %v721 = vpop.trf.xlu0
      %v722 = vpop.trf.xlu0
      %v723 = vpop.trf.xlu0
      %v724 = vpop.trf.xlu0
      %v725 = vpop.trf.xlu0
      %v726 = vpop.trf.xlu0
      %v727 = vpop.trf.xlu0
      %v728 = vpop.trf.xlu0
      %v729 = vpop.trf.xlu0
      %v730 = vpop.trf.xlu0
      %v731 = vpop.trf.xlu0
      %v732 = vpop.trf.xlu0
      %v733 = vpop.trf.xlu0
      %v734 = vpop.trf.xlu0
      %v735 = vpop.trf.xlu0
      %736 = vxpose.xlu0.b32.start [1/16] %v701, 128
      %737 = vxpose.xlu0.b32.cont [2/16] 0.0, 128
      %738 = vxpose.xlu0.b32.cont [3/16] 0.0, 128
      %739 = vxpose.xlu0.b32.cont [4/16] 0.0, 128
      %740 = vxpose.xlu0.b32.cont [5/16] 0.0, 128
      %741 = vxpose.xlu0.b32.cont [6/16] 0.0, 128
      %742 = vxpose.xlu0.b32.cont [7/16] 0.0, 128
      %743 = vxpose.xlu0.b32.cont [8/16] 0.0, 128
      %744 = vxpose.xlu0.b32.cont [9/16] 0.0, 128
      %745 = vxpose.xlu0.b32.cont [10/16] 0.0, 128
      %746 = vxpose.xlu0.b32.cont [11/16] 0.0, 128
      %747 = vxpose.xlu0.b32.cont [12/16] 0.0, 128
      %748 = vxpose.xlu0.b32.cont [13/16] 0.0, 128
      %749 = vxpose.xlu0.b32.cont [14/16] 0.0, 128
      %750 = vxpose.xlu0.b32.cont [15/16] 0.0, 128
      %751 = vxpose.xlu0.b32.end [16/16] 0.0, 128
      %v752 = vpop.trf.xlu0
      %v753 = vpop.trf.xlu0
      %v754 = vpop.trf.xlu0
      %v755 = vpop.trf.xlu0
      %v756 = vpop.trf.xlu0
      %v757 = vpop.trf.xlu0
      %v758 = vpop.trf.xlu0
      %v759 = vpop.trf.xlu0
      %v760 = vpop.trf.xlu0
      %v761 = vpop.trf.xlu0
      %v762 = vpop.trf.xlu0
      %v763 = vpop.trf.xlu0
      %v764 = vpop.trf.xlu0
      %v765 = vpop.trf.xlu0
      %v766 = vpop.trf.xlu0
      %v767 = vpop.trf.xlu0
      %vm768 = vcmask 64512
      %v769 = vsel %vm768, %v720, -inf
      %v770 = vsel %vm768, %v722, -inf
      %v771 = vmax.f32 %v769, %v770
      %v772 = vsel %vm768, %v721, -inf
      %v773 = vsel %vm768, %v723, -inf
      %v774 = vmax.f32 %v772, %v773
      %v775 = vsel %vm768, %v724, -inf
      %v776 = vsel %vm768, %v726, -inf
      %v777 = vmax.f32 %v775, %v776
      %v778 = vsel %vm768, %v725, -inf
      %v779 = vsel %vm768, %v727, -inf
      %v780 = vmax.f32 %v778, %v779
      %v781 = vsel %vm768, %v728, -inf
      %v782 = vsel %vm768, %v730, -inf
      %v783 = vmax.f32 %v781, %v782
      %v784 = vsel %vm768, %v729, -inf
      %v785 = vsel %vm768, %v731, -inf
      %v786 = vmax.f32 %v784, %v785
      %v787 = vsel %vm768, %v732, -inf
      %v788 = vsel %vm768, %v734, -inf
      %v789 = vmax.f32 %v787, %v788
      %v790 = vsel %vm768, %v733, -inf
      %v791 = vsel %vm768, %v735, -inf
      %v792 = vmax.f32 %v790, %v791
      %v793 = vsel %vm768, %v752, -inf
      %v794 = vsel %vm768, %v754, -inf
      %v795 = vmax.f32 %v793, %v794
      %v796 = vsel %vm768, %v753, -inf
      %v797 = vsel %vm768, %v755, -inf
      %v798 = vmax.f32 %v796, %v797
      %v799 = vsel %vm768, %v756, -inf
      %v800 = vsel %vm768, %v758, -inf
      %v801 = vmax.f32 %v799, %v800
      %v802 = vsel %vm768, %v757, -inf
      %v803 = vsel %vm768, %v759, -inf
      %v804 = vmax.f32 %v802, %v803
      %v805 = vsel %vm768, %v760, -inf
      %v806 = vsel %vm768, %v762, -inf
      %v807 = vmax.f32 %v805, %v806
      %v808 = vsel %vm768, %v761, -inf
      %v809 = vsel %vm768, %v763, -inf
      %v810 = vmax.f32 %v808, %v809
      %v811 = vsel %vm768, %v764, -inf
      %v812 = vsel %vm768, %v766, -inf
      %v813 = vmax.f32 %v811, %v812
      %v814 = vsel %vm768, %v765, -inf
      %v815 = vsel %vm768, %v767, -inf
      %v816 = vmax.f32 %v814, %v815
      %v817 = vrot.slane %v771, 1
      %v818 = vrot.slane %v777, 1
      %v819 = vrot.slane %v783, 1
      %v820 = vrot.slane %v789, 1
      %v821 = vrot.slane %v795, 1
      %v822 = vrot.slane %v801, 1
      %v823 = vrot.slane %v807, 1
      %v824 = vrot.slane %v813, 1
      %v825 = vrot.slane %v774, 1
      %v826 = vrot.slane %v780, 1
      %v827 = vrot.slane %v786, 1
      %v828 = vrot.slane %v792, 1
      %v829 = vrot.slane %v798, 1
      %v830 = vrot.slane %v804, 1
      %v831 = vrot.slane %v810, 1
      %v832 = vrot.slane %v816, 1
      %v833 = vlaneseq
      %v834 = vshrl.u32 %v833, 7
      %vm835 = vcmp.lt.s32.totalorder %v834, 7
      %v836 = vsel %vm835, %v817, %v825
      %v837 = vsel %vm835, %v818, %v826
      %v838 = vsel %vm835, %v819, %v827
      %v839 = vsel %vm835, %v820, %v828
      %v840 = vsel %vm835, %v821, %v829
      %v841 = vsel %vm835, %v822, %v830
      %v842 = vsel %vm835, %v823, %v831
      %v843 = vsel %vm835, %v824, %v832
      %v844 = vsel %vm835, %v825, %v817
      %v845 = vsel %vm835, %v826, %v818
      %v846 = vsel %vm835, %v827, %v819
      %v847 = vsel %vm835, %v828, %v820
      %v848 = vsel %vm835, %v829, %v821
      %v849 = vsel %vm835, %v830, %v822
      %v850 = vsel %vm835, %v831, %v823
      %v851 = vsel %vm835, %v832, %v824
      %v852 = vmax.f32 %v771, %v836
      %v853 = vmax.f32 %v774, %v844
      %v854 = vmax.f32 %v777, %v837
      %v855 = vmax.f32 %v780, %v845
      %v856 = vmax.f32 %v783, %v838
      %v857 = vmax.f32 %v786, %v846
      %v858 = vmax.f32 %v789, %v839
      %v859 = vmax.f32 %v792, %v847
      %v860 = vmax.f32 %v795, %v840
      %v861 = vmax.f32 %v798, %v848
      %v862 = vmax.f32 %v801, %v841
      %v863 = vmax.f32 %v804, %v849
      %v864 = vmax.f32 %v807, %v842
      %v865 = vmax.f32 %v810, %v850
      %v866 = vmax.f32 %v813, %v843
      %v867 = vmax.f32 %v816, %v851
      %868 = vst.msk [vmem:[#allocation2] sm:$0xff] %vm768, %v852
      %869 = vst.msk [vmem:[#allocation2 + $0x8] sm:$0xff] %vm768, %v853
      %870 = vst.msk [vmem:[#allocation2 + $0x10] sm:$0xff] %vm768, %v854
      %871 = vst.msk [vmem:[#allocation2 + $0x18] sm:$0xff] %vm768, %v855
      %872 = vst.msk [vmem:[#allocation2 + $0x20] sm:$0xff] %vm768, %v856
      %873 = vst.msk [vmem:[#allocation2 + $0x28] sm:$0xff] %vm768, %v857
      %874 = vst.msk [vmem:[#allocation2 + $0x30] sm:$0xff] %vm768, %v858
      %875 = vst.msk [vmem:[#allocation2 + $0x38] sm:$0xff] %vm768, %v859
      %876 = vst.msk [vmem:[#allocation2 + $0x40] sm:$0xff] %vm768, %v860
      %877 = vst.msk [vmem:[#allocation2 + $0x48] sm:$0xff] %vm768, %v861
      %878 = vst.msk [vmem:[#allocation2 + $0x50] sm:$0xff] %vm768, %v862
      %879 = vst.msk [vmem:[#allocation2 + $0x58] sm:$0xff] %vm768, %v863
      %880 = vst.msk [vmem:[#allocation2 + $0x60] sm:$0xff] %vm768, %v864
      %881 = vst.msk [vmem:[#allocation2 + $0x68] sm:$0xff] %vm768, %v865
      %882 = vst.msk [vmem:[#allocation2 + $0x70] sm:$0xff] %vm768, %v866
      %883 = vst.msk [vmem:[#allocation2 + $0x78] sm:$0xff] %vm768, %v867
      %v884 = vld [vmem:[#allocation2] ss:$2 sm:$0xff]
      %s885 = scalar_lea.vmem [#allocation2], 16
      %v886 = vld [vmem:[%s885] ss:$2 sm:$0xff]
      %s887 = scalar_lea.vmem [#allocation2], 32
      %v888 = vld [vmem:[%s887] ss:$2 sm:$0xff]
      %s889 = scalar_lea.vmem [#allocation2], 48
      %v890 = vld [vmem:[%s889] ss:$2 sm:$0xff]
      %s891 = scalar_lea.vmem [#allocation2], 64
      %v892 = vld [vmem:[%s891] ss:$2 sm:$0xff]
      %s893 = scalar_lea.vmem [#allocation2], 80
      %v894 = vld [vmem:[%s893] ss:$2 sm:$0xff]
      %s895 = scalar_lea.vmem [#allocation2], 96
      %v896 = vld [vmem:[%s895] ss:$2 sm:$0xff]
      %s897 = scalar_lea.vmem [#allocation2], 112
      %v898 = vld [vmem:[%s897] ss:$2 sm:$0xff]
      %899 = vst.msk [vmem:[%s291] sm:$0xff] %vm768, %v884
      %900 = vst.msk [vmem:[%s291 + $0x8] sm:$0xff] %vm768, %v886
      %901 = vst.msk [vmem:[%s291 + $0x10] sm:$0xff] %vm768, %v888
      %902 = vst.msk [vmem:[%s291 + $0x18] sm:$0xff] %vm768, %v890
      %903 = vst.msk [vmem:[%s291 + $0x20] sm:$0xff] %vm768, %v892
      %904 = vst.msk [vmem:[%s291 + $0x28] sm:$0xff] %vm768, %v894
      %905 = vst.msk [vmem:[%s291 + $0x30] sm:$0xff] %vm768, %v896
      %906 = vst.msk [vmem:[%s291 + $0x38] sm:$0xff] %vm768, %v898
      %p907 = scmp.lt.s32.totalorder %s19, 1
      %s908 = scalar_select %p907, %s19, 1
      %s909 = smul.addr %s908, 2
      %s910 = smul.addr %s909, 8
      %s911 = scalar_lea.vmem %s6, %s910
      %p912 = scmp.lt.s32.totalorder %s19, 1
      %s913 = scalar_select %p912, %s19, 1
      %s914 = smul.addr %s913, 8
      %s915 = smul.addr %s914, 8
      %s916 = scalar_lea.vmem %s7, %s915
      // Predicated region
      $region45: #{downsample_block_forward.1} parent=43 // pred_check
        %p917 = pneg %p168
      $region46: #{downsample_block_forward.1} parent=43 // pred_check_branch
        %919 = sbr.rel (%p917) target = $region48
      $region47: #{downsample_block_forward.1} parent=43 // pred_region
        _
      $region48: #{downsample_block_forward.1} parent=43 // pred_fallthru
        _
      // Predicated region
      $region49: #{downsample_block_forward.1} parent=43 // pred_check
        %p920 = pneg %p194
      $region50: #{downsample_block_forward.1} parent=43 // pred_check_branch
        %922 = sbr.rel (%p920) target = $region52
      $region51: #{downsample_block_forward.1} parent=43 // pred_region
        _
      $region52: #{downsample_block_forward.1} parent=43 // pred_fallthru
        _
    $region44: #{downsample_block_forward.1} parent=5 // pred_fallthru
      _
    %p923 = scmp.le.s32.totalorder 2, %s14
    // Predicated region
    $region53: #{downsample_block_forward.1} parent=5 // pred_check
      %p924 = pneg %p923
    $region54: #{downsample_block_forward.1} parent=5 // pred_check_branch
      %926 = sbr.rel (%p924) target = $region56
    $region55: #{downsample_block_forward.1} parent=5 // pred_region
      %s927 = ssub.s32 %s14, 2
      // Predicated region
      $region57: #{downsample_block_forward.1} parent=55 // pred_check
        %p928 = pneg %p174
      $region58: #{downsample_block_forward.1} parent=55 // pred_check_branch
        %930 = sbr.rel (%p928) target = $region60
      $region59: #{downsample_block_forward.1} parent=55 // pred_region
        %p931 = scmp.lt.s32.totalorder %s20, 1
        %s932 = scalar_select %p931, %s20, 1
        %s933 = smul.addr %s932, 2
        %s934 = smul.addr %s933, 8
        %s935 = scalar_lea.vmem %s6, %s934
      $region60: #{downsample_block_forward.1} parent=55 // pred_fallthru
        _
      // Predicated region
      $region61: #{downsample_block_forward.1} parent=55 // pred_check
        %p936 = pneg %p200
      $region62: #{downsample_block_forward.1} parent=55 // pred_check_branch
        %938 = sbr.rel (%p936) target = $region64
      $region63: #{downsample_block_forward.1} parent=55 // pred_region
        %p939 = scmp.lt.s32.totalorder %s20, 1
        %s940 = scalar_select %p939, %s20, 1
        %s941 = smul.addr %s940, 8
        %s942 = smul.addr %s941, 8
        %s943 = scalar_lea.vmem %s7, %s942
      $region64: #{downsample_block_forward.1} parent=55 // pred_fallthru
        _
    $region56: #{downsample_block_forward.1} parent=5 // pred_fallthru
      _
  $region6: #{downsample_block_forward.1} parent=0 // loop_footer
    %s18 = sadd.s32 1, %s14
  $region7: #{downsample_block_forward.1} parent=0 // loop_footer_branch
    %13 = sbr.rel target = $region3
  $region8: #{downsample_block_forward.1} parent=0 // loop_exit
    _

</llo_original>
